<compile_context>
chip_gen: v6e
topology: v6e:2x2x1
jax: 0.10.0
libtpu: 0.0.40
codegen_flags: <defaults>
</compile_context>

<pallas_src>
import functools

import jax
import jax.numpy as jnp
from jax.experimental import pallas as pl
from jax.experimental.pallas import tpu as pltpu

LANE = 128
MAX_COLS = 8192                       # lane-dense output slab cap


def _sublane_multiple(dtype) -> int:
    # Sub-32-bit dtypes pack along sublanes: bf16 -> 16 rows/vreg, int8/fp8 -> 32.
    itemsize = jnp.dtype(dtype).itemsize
    if itemsize >= 4:
        return 8
    return 8 * (4 // itemsize)


def _tiling_params():
    """(target_tile_bytes, vmem_limit_bytes), gated per TPU generation."""
    vmem = None
    try:
        info = pltpu.get_tpu_info()
        vmem = getattr(info, "vmem_capacity_bytes", None)
    except Exception:
        vmem = None
    if vmem is None:
        vmem = 64 * 1024 * 1024            # conservative: assume v7x-sized VMEM
    if vmem >= 96 * 1024 * 1024:           # v5e / v6e: 128 MiB physical VMEM
        return 16 * 1024 * 1024, 80 * 1024 * 1024
    # v7x: 64 MiB per-TC VMEM; 4 live 8 MiB double-buffered tiles = 32 MiB.
    return 8 * 1024 * 1024, 40 * 1024 * 1024


def _identity_kernel(x_ref, o_ref):
    # Elementwise identity: copy the current VMEM tile to the output tile.
    o_ref[...] = x_ref[...]


def _straight_through_impl(x: jax.Array, *, donate: bool) -> jax.Array:
    orig_shape = x.shape
    n = x.size
    if n == 0:
        return x

    itemsize = jnp.dtype(x.dtype).itemsize
    sublane = _sublane_multiple(x.dtype)
    target_tile_bytes, vmem_limit_bytes = _tiling_params()

    aliases = {0: 0} if donate else {}
    cost = pl.CostEstimate(flops=0, transcendentals=0,
                           bytes_accessed=2 * n * itemsize)
    cparams = pltpu.CompilerParams(
        dimension_semantics=("parallel",),
        vmem_limit_bytes=vmem_limit_bytes,
    )

    if n % LANE == 0:
        # ---- lane-dense 2-D collapse (pure reshape, no data movement).
        cols = min(MAX_COLS, n)
        cols -= cols % LANE
        while cols >= LANE and n % cols:
            cols -= LANE
        rows = n // cols                        # cols >= 128 guaranteed here
        x2d = x.reshape(rows, cols)
        row_bytes = cols * itemsize

        tile_rows = max(sublane,
                        (target_tile_bytes // row_bytes) // sublane * sublane)
        if tile_rows >= rows:
            tile_rows = rows                    # full-extent: exempt from (8,128)
            # Split into >=2 grid steps for mid/large arrays so both v7x
            # TensorCores (and both DMA paths) get work.
            if rows >= 2 * sublane and rows * row_bytes >= (1 << 21):
                half = ((pl.cdiv(rows, 2) + sublane - 1) // sublane) * sublane
                if half < rows:
                    tile_rows = half
        if tile_rows < rows and rows % tile_rows:
            # Prefer an exact divisor near the target (unmasked last block).
            lo = max(sublane, tile_rows // 2)
            t = tile_rows
            while t >= lo and rows % t:
                t -= sublane
            if t >= lo and rows % t == 0:
                tile_rows = t

        grid = (pl.cdiv(rows, tile_rows),)      # ragged last block masked by Pallas
        out2d = pl.pallas_call(
            _identity_kernel,
            out_shape=jax.ShapeDtypeStruct((rows, cols), x.dtype),
            grid_spec=pltpu.PrefetchScalarGridSpec(
                num_scalar_prefetch=0,
                grid=grid,
                in_specs=[pl.BlockSpec((tile_rows, cols), lambda i: (i, 0))],
                out_specs=pl.BlockSpec((tile_rows, cols), lambda i: (i, 0)),
            ),
            input_output_aliases=aliases,
            compiler_params=cparams,
            cost_estimate=cost,
        )(x2d)
        return out2d.reshape(orig_shape)

    # ---- fallback: n not a multiple of 128.  Flatten to 1-D and tile with a
    # multiple-of-(sublane*128) block; the ragged final block is masked.
    x1d = x.reshape(n)
    blk_quant = sublane * LANE
    block = max(blk_quant,
                (target_tile_bytes // itemsize) // blk_quant * blk_quant)
    if block >= n:
        block = n                               # single full-extent block (exempt)
    grid = (pl.cdiv(n, block),)
    out1d = pl.pallas_call(
        _identity_kernel,
        out_shape=jax.ShapeDtypeStruct((n,), x.dtype),
        grid_spec=pltpu.PrefetchScalarGridSpec(
            num_scalar_prefetch=0,
            grid=grid,
            in_specs=[pl.BlockSpec((block,), lambda i: (i,))],
            out_specs=pl.BlockSpec((block,), lambda i: (i,)),
        ),
        input_output_aliases=aliases,
        compiler_params=cparams,
        cost_estimate=cost,
    )(x1d)
    return out1d.reshape(orig_shape)


# Default entry point: runs the Pallas kernel, NO alias (caller keeps `x`).
straight_through = jax.jit(functools.partial(_straight_through_impl, donate=False))
# Donated entry point: caller gives up `x`; alias lets XLA reuse the buffer.
straight_through_donated = jax.jit(
    functools.partial(_straight_through_impl, donate=True), donate_argnums=0)


def straight_through_noop(x):
    # True optimum for a pure identity forward: no kernel, zero HBM traffic.
    return x


if __name__ == "__main__":
    # StraightThrough(channel_num=1) has no parameters; forward(x) == x.
    key = jax.random.PRNGKey(0)
    k0, k1, k2 = jax.random.split(key, 3)

    # Small NCHW input, f32, 128-divisible element count -> 2-D lane-dense path.
    x = jax.random.normal(k0, (2, 4, 16, 16), dtype=jnp.float32)
    y = jax.block_until_ready(straight_through(x))
    assert y.shape == x.shape and y.dtype == x.dtype
    assert jnp.array_equal(y, x)

    # Non-multiple-of-128 element count -> 1-D fallback path.
    z = jax.random.normal(k1, (3, 5, 7), dtype=jnp.float32)
    zy = jax.block_until_ready(straight_through(z))
    assert zy.shape == z.shape and jnp.array_equal(zy, z)

    # Donated / aliased variant (bf16 exercises dtype-aware sublane rounding).
    w = jax.random.normal(k2, (2, 4, 16, 16), dtype=jnp.bfloat16)
    w_copy = jnp.array(w)                      # keep a reference for the check
    wy = jax.block_until_ready(straight_through_donated(w))
    assert wy.shape == w_copy.shape and wy.dtype == w_copy.dtype
    assert jnp.array_equal(wy, w_copy)

    print("KERNEL_OK")
</pallas_src>

<mosaic_0001>
module attributes {stable_mosaic.version = 11 : i64} {
  func.func @_identity_kernel(%arg0: i32, %arg1: memref<1x2048xf32, #tpu.memory_space<vmem>>, %arg2: memref<1x2048xf32, #tpu.memory_space<vmem>>) attributes {dimension_semantics = [#tpu.dimension_semantics<parallel>], iteration_bounds = array<i64: 1>, scalar_prefetch = 0 : i64, scratch_operands = 0 : i64, tpu.core_type = #tpu.core_type<tc>, window_params = [{transform_indices = @transform_0, window_bounds = array<i64: 1, 2048>}, {transform_indices = @transform_1, window_bounds = array<i64: 1, 2048>}]} {
    %c0 = arith.constant 0 : index
    %c0_0 = arith.constant 0 : index
    %0 = vector.load %arg1[%c0, %c0_0] : memref<1x2048xf32, #tpu.memory_space<vmem>>, vector<1x2048xf32>
    %c0_1 = arith.constant 0 : index
    %c0_2 = arith.constant 0 : index
    %1 = vector.load %arg2[%c0_1, %c0_2] : memref<1x2048xf32, #tpu.memory_space<vmem>>, vector<1x2048xf32>
    tpu.vector_store %arg2[%c0_1, %c0_2], %0 {strides = array<i32>} : memref<1x2048xf32, #tpu.memory_space<vmem>>, vector<1x2048xf32>,
    return
  }
  func.func @transform_0(%arg0: i32) -> (i32, i32) {
    %c0_i32 = arith.constant 0 : i32
    %c0_i32_0 = arith.constant 0 : i32
    return %arg0, %c0_i32 : i32, i32
  }
  func.func @transform_1(%arg0: i32) -> (i32, i32) {
    %c0_i32 = arith.constant 0 : i32
    %c0_i32_0 = arith.constant 0 : i32
    return %arg0, %c0_i32 : i32, i32
  }
}

</mosaic_0001>

<llo_original>
// kernel: _straight_through_impl.1
$region0: #{_straight_through_impl.1}
  #allocation0 [shape = 'u32[]', space=smem, size = 0x4, offset = 0x4, fixed_abs, tag = 'smem constant byte address 0x4 - core index']
  #allocation1 [shape = 'u32[144,128]{1,0:T(1,128)}', space=vmem, size = 0x12000, scoped, tag = 'internal scratch']
  %s0 = inlined_call_operand.vmem [shape: f32[1,2048], index: 0, kind: input, shape index: {}]
  %s1 = inlined_call_operand.vmem [shape: f32[1,2048], index: 1, kind: output, shape index: {}]
  %s2 = sld [smem:[#allocation0]]
  $region14: #{_straight_through_impl.1} parent=0
    _
  %s4 = ssub.s32 1, %s2
  %s5 = scalar_select 0, %s4, %s2
  // Predicated region
  $region2: #{_straight_through_impl.1} parent=0 // pred_check
    _
  $region3: #{_straight_through_impl.1} parent=0 // pred_check_branch
    %7 = sbr.rel (0) target = $region5
  $region4: #{_straight_through_impl.1} parent=0 // pred_region
    _
  $region5: #{_straight_through_impl.1} parent=0 // pred_fallthru
    _
  %v8 = vld [vmem:[%s0] sm:$0xff]
  %v9 = vld [vmem:[%s0 + $0x8] sm:$0xff]
  %10 = vst [vmem:[%s1] sm:$0xff] %v8
  %11 = vst [vmem:[%s1 + $0x8] sm:$0xff] %v9
  // Predicated region
  $region6: #{_straight_through_impl.1} parent=0 // pred_check
    _
  $region7: #{_straight_through_impl.1} parent=0 // pred_check_branch
    %13 = sbr.rel (0) target = $region9
  $region8: #{_straight_through_impl.1} parent=0 // pred_region
    _
  $region9: #{_straight_through_impl.1} parent=0 // pred_fallthru
    _
  // Predicated region
  $region10: #{_straight_through_impl.1} parent=0 // pred_check
    _
  $region11: #{_straight_through_impl.1} parent=0 // pred_check_branch
    %15 = sbr.rel (0) target = $region13
  $region12: #{_straight_through_impl.1} parent=0 // pred_region
    _
  $region13: #{_straight_through_impl.1} parent=0 // pred_fallthru
    _

</llo_original>
